<compile_context>
chip_gen: v6e
topology: v6e:2x2x1
jax: 0.10.0
libtpu: 0.0.40
codegen_flags: <defaults>
</compile_context>

<pallas_src>
import functools

import jax
import jax.numpy as jnp
from jax import lax
from jax.experimental import pallas as pl
from jax.experimental.pallas import tpu as pltpu

LN_EPS = 1e-5  # torch.nn.LayerNorm default
LANE = 128
SUBLANE = 8


def _round_up(n, m):
    return (n + m - 1) // m * m


def _pad2(a, rows, cols):
    return jnp.pad(a, ((0, rows - a.shape[0]), (0, cols - a.shape[1])))


def _pad_row(a, cols):
    a = a.reshape(1, -1).astype(jnp.float32)
    return jnp.pad(a, ((0, 0), (0, cols - a.shape[1])))


def dqn_kernel(x_ref, w1_ref, w2_ref, w3_ref, lnp_ref, b3_ref, out_ref, *,
               hidden_real, hidden_pad):
    inv_h = jnp.float32(1.0 / hidden_real)
    need_mask = hidden_pad != hidden_real
    if need_mask:
        col_ok = lax.broadcasted_iota(jnp.int32, (1, hidden_pad), 1) < hidden_real

    def ln_relu(h, g, be):
        # Two-pass LayerNorm over the *real* hidden features (padded columns
        # are masked out of the variance and end up exactly zero after
        # gamma/beta, so the following zero-rows matmul is unaffected).
        mu = jnp.sum(h, axis=-1, keepdims=True) * inv_h
        d = h - mu
        if need_mask:
            d = jnp.where(col_ok, d, 0.0)
        var = jnp.sum(d * d, axis=-1, keepdims=True) * inv_h
        y = d * lax.rsqrt(var + LN_EPS) * g + be
        return jnp.maximum(y, 0.0)

    # Cast in-register: x streams as (tb, input_dim) f32, no padded HBM copy.
    x = x_ref[...].astype(jnp.bfloat16)

    b1 = lnp_ref[0:1, :]
    g1 = lnp_ref[1:2, :]
    be1 = lnp_ref[2:3, :]
    b2 = lnp_ref[3:4, :]
    g2 = lnp_ref[4:5, :]
    be2 = lnp_ref[5:6, :]

    # fc1 -> LayerNorm -> ReLU   (dropout1: identity in eval mode)
    h = jnp.dot(x, w1_ref[...], preferred_element_type=jnp.float32) + b1
    h = ln_relu(h, g1, be1).astype(jnp.bfloat16)

    # fc2 -> LayerNorm -> ReLU   (dropout2: identity in eval mode)
    h = jnp.dot(h, w2_ref[...], preferred_element_type=jnp.float32) + b2
    h = ln_relu(h, g2, be2).astype(jnp.bfloat16)

    # fc3 (Q-values, no activation)
    out = jnp.dot(h, w3_ref[...], preferred_element_type=jnp.float32) + b3_ref[...]
    out_ref[...] = out.astype(out_ref.dtype)


def prepare_params(params):
    """One-time padding + bf16 cast of weights (hoisted out of the hot path).

    Weights are stored transposed (in, out); hidden/output dims are padded to
    128 lanes with zeros, input dim is left unpadded (x streams unpadded)."""
    input_dim, hidden_dim = params["w1"].shape
    output_dim = params["w3"].shape[1]
    hid_pad = _round_up(hidden_dim, LANE)
    out_pad = _round_up(output_dim, LANE)

    w1 = _pad2(params["w1"].astype(jnp.bfloat16), input_dim, hid_pad)
    w2 = _pad2(params["w2"].astype(jnp.bfloat16), hid_pad, hid_pad)
    w3 = _pad2(params["w3"].astype(jnp.bfloat16), hid_pad, out_pad)
    lnp = jnp.concatenate([
        _pad_row(params["b1"], hid_pad),
        _pad_row(params["g1"], hid_pad),
        _pad_row(params["be1"], hid_pad),
        _pad_row(params["b2"], hid_pad),
        _pad_row(params["g2"], hid_pad),
        _pad_row(params["be2"], hid_pad),
    ], axis=0)                                   # (6, hid_pad) f32
    b3 = _pad_row(params["b3"], out_pad)         # (1, out_pad) f32

    return {
        "w1": w1, "w2": w2, "w3": w3, "lnp": lnp, "b3": b3,
        "dims": (int(input_dim), int(hidden_dim), int(output_dim)),
    }


def _vmem_limit_bytes(need_bytes):
    """Generation-aware VMEM budget: ~20% headroom below physical capacity."""
    try:
        cap = int(pltpu.get_tpu_info().vmem_capacity_bytes)
    except Exception:
        cap = 64 * 1024 * 1024  # conservative (v7x-sized) fallback
    return int(min(max(need_bytes * 3 // 2, 32 * 1024 * 1024), int(cap * 0.8)))


def dq_network_forward(x, prep, *, batch_tile=2048):
    """Forward pass. x: (batch, input_dim) or (input_dim,) float32.
    `prep` is the output of prepare_params()."""
    if x.ndim == 1:
        x = x[None, :]  # mimic torch's unsqueeze(0) on 1-D input
    batch, input_dim = x.shape
    in_real, hidden_dim, output_dim = prep["dims"]
    assert input_dim == in_real, "x feature dim does not match prepared params"

    hid_pad = prep["w2"].shape[0]
    out_pad = prep["b3"].shape[1]

    # Batch tile: big enough to amortize the ~0.35us/step pipeline overhead,
    # but split so the grid has >= 2 steps whenever the batch allows it
    # (so the "parallel" batch axis can shard across both v7x TensorCores).
    batch_tile = max(SUBLANE, _round_up(batch_tile, SUBLANE))
    tb = min(batch_tile, _round_up(max(pl.cdiv(batch, 2), 1), SUBLANE))
    batch_pad = _round_up(batch, tb)
    if batch_pad != batch:
        x = jnp.pad(x, ((0, batch_pad - batch), (0, 0)))  # rows only; tiny
    x = x.astype(jnp.float32)

    grid = (batch_pad // tb,)

    def const(shape):  # resident across all grid steps (no re-DMA)
        return pl.BlockSpec(shape, lambda i: (0, 0))

    flops = int(2 * batch * (input_dim * hidden_dim
                             + hidden_dim * hidden_dim
                             + hidden_dim * output_dim))
    bytes_accessed = int(batch_pad * input_dim * 4
                         + (prep["w1"].size + prep["w2"].size + prep["w3"].size) * 2
                         + batch_pad * out_pad * 2)

    # VMEM need: double-buffered resident weights + double-buffered x/out
    # tiles + ~4 activation-sized f32 temporaries + tiny LN params.
    vmem_need = (2 * (prep["w1"].size + prep["w2"].size + prep["w3"].size) * 2
                 + 2 * (tb * input_dim * 4 + tb * out_pad * 2)
                 + 4 * tb * hid_pad * 4
                 + 2 * (prep["lnp"].size + prep["b3"].size) * 4)
    vmem_limit = _vmem_limit_bytes(vmem_need)

    out_padded = pl.pallas_call(
        functools.partial(dqn_kernel, hidden_real=hidden_dim, hidden_pad=hid_pad),
        out_shape=jax.ShapeDtypeStruct((batch_pad, out_pad), jnp.bfloat16),
        grid=grid,
        in_specs=[
            pl.BlockSpec((tb, input_dim), lambda i: (i, 0)),  # x (streamed, unpadded feat)
            const((input_dim, hid_pad)),                       # w1 (resident)
            const((hid_pad, hid_pad)),                         # w2 (resident)
            const((hid_pad, out_pad)),                         # w3 (resident)
            const((6, hid_pad)),                               # b1,g1,be1,b2,g2,be2 packed
            const((1, out_pad)),                               # b3
        ],
        out_specs=pl.BlockSpec((tb, out_pad), lambda i: (i, 0)),
        compiler_params=pltpu.CompilerParams(
            dimension_semantics=("parallel",),
            vmem_limit_bytes=vmem_limit),
        cost_estimate=pl.CostEstimate(
            flops=flops,
            transcendentals=int(2 * batch),
            bytes_accessed=bytes_accessed),
    )(x, prep["w1"], prep["w2"], prep["w3"], prep["lnp"], prep["b3"])

    # Tiny (batch, output_dim) slice + f32 cast; padded rows/cols discarded.
    return out_padded[:batch, :output_dim].astype(jnp.float32)


def init_params(key, input_dim, hidden_dim, output_dim):
    """Deterministic init mirroring nn.Linear (uniform +/-1/sqrt(fan_in)) and
    nn.LayerNorm (gamma=1, beta=0). Weights stored transposed: (in, out)."""
    ks = jax.random.split(key, 6)

    def linear(kw, kb, fan_in, fan_out):
        bound = 1.0 / jnp.sqrt(fan_in)
        w = jax.random.uniform(kw, (fan_in, fan_out), jnp.float32, -bound, bound)
        b = jax.random.uniform(kb, (1, fan_out), jnp.float32, -bound, bound)
        return w, b

    w1, b1 = linear(ks[0], ks[1], input_dim, hidden_dim)
    w2, b2 = linear(ks[2], ks[3], hidden_dim, hidden_dim)
    w3, b3 = linear(ks[4], ks[5], hidden_dim, output_dim)
    return {
        "w1": w1, "b1": b1,
        "g1": jnp.ones((1, hidden_dim), jnp.float32),
        "be1": jnp.zeros((1, hidden_dim), jnp.float32),
        "w2": w2, "b2": b2,
        "g2": jnp.ones((1, hidden_dim), jnp.float32),
        "be2": jnp.zeros((1, hidden_dim), jnp.float32),
        "w3": w3, "b3": b3,
    }


def reference_forward(x, params, *, matmul_dtype=jnp.float32):
    """Pure-JAX reference. matmul_dtype=bf16 matches the kernel's precision."""
    if x.ndim == 1:
        x = x[None, :]

    def ln(h, g, b):
        mu = jnp.mean(h, axis=-1, keepdims=True)
        var = jnp.mean((h - mu) ** 2, axis=-1, keepdims=True)
        return (h - mu) * lax.rsqrt(var + LN_EPS) * g + b

    def mm(a, w):
        return jnp.dot(a.astype(matmul_dtype), w.astype(matmul_dtype),
                       preferred_element_type=jnp.float32)

    h = jnp.maximum(ln(mm(x, params["w1"]) + params["b1"],
                       params["g1"], params["be1"]), 0.0)
    h = jnp.maximum(ln(mm(h, params["w2"]) + params["b2"],
                       params["g2"], params["be2"]), 0.0)
    return mm(h, params["w3"]) + params["b3"]


if __name__ == "__main__":
    input_dim, hidden_dim, output_dim = 16, 32, 8
    batch = 4

    key = jax.random.PRNGKey(0)
    kx, kp = jax.random.split(key)
    params = init_params(kp, input_dim, hidden_dim, output_dim)
    prep = prepare_params(params)  # one-time pad + bf16 cast (out of hot path)
    x = jax.random.normal(kx, (batch, input_dim), jnp.float32)

    out = dq_network_forward(x, prep)
    out = jax.block_until_ready(out)
    assert out.shape == (batch, output_dim)

    # Matched-precision reference (bf16 matmul inputs, f32 accumulation);
    # kernel output is stored bf16, hence the slightly relaxed tolerance.
    ref_bf16 = reference_forward(x, params, matmul_dtype=jnp.bfloat16)
    assert jnp.allclose(out, ref_bf16, atol=3e-2, rtol=3e-2), "mismatch vs bf16 reference"

    # Sanity vs. full-f32 reference (bf16 quantization error only).
    ref_f32 = reference_forward(x, params)
    assert jnp.allclose(out, ref_f32, atol=1e-1, rtol=1e-1), "drifted vs f32 reference"

    # Exercise the 1-D (unsqueeze) path as well.
    out1 = jax.block_until_ready(dq_network_forward(x[0], prep))
    assert out1.shape == (1, output_dim)
    assert jnp.allclose(out1, ref_bf16[:1], atol=3e-2, rtol=3e-2)

    # Exercise a multi-tile grid (>= 2 steps -> both v7x TensorCores).
    xb = jax.random.normal(kx, (64, input_dim), jnp.float32)
    outb = jax.block_until_ready(dq_network_forward(xb, prep, batch_tile=32))
    refb = reference_forward(xb, params, matmul_dtype=jnp.bfloat16)
    assert outb.shape == (64, output_dim)
    assert jnp.allclose(outb, refb, atol=3e-2, rtol=3e-2), "mismatch on multi-tile grid"

    print("KERNEL_OK")
</pallas_src>

<mosaic_0001>
module attributes {stable_mosaic.version = 11 : i64} {
  func.func @dqn_kernel(%arg0: i32, %arg1: memref<8x16xf32, #tpu.memory_space<vmem>>, %arg2: memref<16x128xbf16, #tpu.memory_space<vmem>>, %arg3: memref<128x128xbf16, #tpu.memory_space<vmem>>, %arg4: memref<128x128xbf16, #tpu.memory_space<vmem>>, %arg5: memref<6x128xf32, #tpu.memory_space<vmem>>, %arg6: memref<1x128xf32, #tpu.memory_space<vmem>>, %arg7: memref<8x128xbf16, #tpu.memory_space<vmem>>) attributes {dimension_semantics = [#tpu.dimension_semantics<parallel>], iteration_bounds = array<i64: 1>, scalar_prefetch = 0 : i64, scratch_operands = 0 : i64, tpu.core_type = #tpu.core_type<tc>, window_params = [{transform_indices = @transform_0, window_bounds = array<i64: 8, 16>}, {pipeline_mode = #tpu.pipeline_mode<synchronous>, transform_indices = @transform_1, window_bounds = array<i64: 16, 128>}, {pipeline_mode = #tpu.pipeline_mode<synchronous>, transform_indices = @transform_2, window_bounds = array<i64: 128, 128>}, {pipeline_mode = #tpu.pipeline_mode<synchronous>, transform_indices = @transform_3, window_bounds = array<i64: 128, 128>}, {pipeline_mode = #tpu.pipeline_mode<synchronous>, transform_indices = @transform_4, window_bounds = array<i64: 6, 128>}, {pipeline_mode = #tpu.pipeline_mode<synchronous>, transform_indices = @transform_5, window_bounds = array<i64: 1, 128>}, {transform_indices = @transform_6, window_bounds = array<i64: 8, 128>}]} {
    %0 = tpu.iota {dimensions = array<i32: 1>} : vector<1x128xi32>
    %c32_i32 = arith.constant 32 : i32
    %1 = vector.broadcast %c32_i32 : i32 to vector<1x128xi32>
    %2 = arith.cmpi slt, %0, %1 : vector<1x128xi32>
    %c0 = arith.constant 0 : index
    %c0_0 = arith.constant 0 : index
    %3 = vector.load %arg1[%c0, %c0_0] : memref<8x16xf32, #tpu.memory_space<vmem>>, vector<8x16xf32>
    %4 = arith.truncf %3 : vector<8x16xf32> to vector<8x16xbf16>
    %c0_1 = arith.constant 0 : index
    %c0_2 = arith.constant 0 : index
    %5 = vector.load %arg5[%c0_1, %c0_2] : memref<6x128xf32, #tpu.memory_space<vmem>>, vector<1x128xf32>
    %c1 = arith.constant 1 : index
    %c0_3 = arith.constant 0 : index
    %6 = vector.load %arg5[%c1, %c0_3] : memref<6x128xf32, #tpu.memory_space<vmem>>, vector<1x128xf32>
    %c2 = arith.constant 2 : index
    %c0_4 = arith.constant 0 : index
    %7 = vector.load %arg5[%c2, %c0_4] : memref<6x128xf32, #tpu.memory_space<vmem>>, vector<1x128xf32>
    %c3 = arith.constant 3 : index
    %c0_5 = arith.constant 0 : index
    %8 = vector.load %arg5[%c3, %c0_5] : memref<6x128xf32, #tpu.memory_space<vmem>>, vector<1x128xf32>
    %c4 = arith.constant 4 : index
    %c0_6 = arith.constant 0 : index
    %9 = vector.load %arg5[%c4, %c0_6] : memref<6x128xf32, #tpu.memory_space<vmem>>, vector<1x128xf32>
    %c5 = arith.constant 5 : index
    %c0_7 = arith.constant 0 : index
    %10 = vector.load %arg5[%c5, %c0_7] : memref<6x128xf32, #tpu.memory_space<vmem>>, vector<1x128xf32>
    %c0_8 = arith.constant 0 : index
    %c0_9 = arith.constant 0 : index
    %11 = vector.load %arg2[%c0_8, %c0_9] : memref<16x128xbf16, #tpu.memory_space<vmem>>, vector<16x128xbf16>
    %cst = arith.constant dense<0.000000e+00> : vector<8x128xf32>
    %12 = tpu.matmul %4, %11, %cst {dimension_numbers = #tpu.dot_dimension_numbers<[1], [0], [0], [1], [0, 0, 1, 1], [], []>} : vector<8x16xbf16>, vector<16x128xbf16>, vector<8x128xf32> -> vector<8x128xf32>
    %13 = vector.broadcast %5 : vector<1x128xf32> to vector<8x128xf32>
    %14 = arith.addf %12, %13 : vector<8x128xf32>
    %cst_10 = arith.constant dense<0.000000e+00> : vector<8xf32>
    %15 = vector.multi_reduction <add>, %14, %cst_10 [1] : vector<8x128xf32> to vector<8xf32>
    %16 = vector.shape_cast %15 : vector<8xf32> to vector<8x1xf32>
    %cst_11 = arith.constant 3.125000e-02 : f32
    %17 = vector.broadcast %cst_11 : f32 to vector<8x1xf32>
    %18 = arith.mulf %16, %17 : vector<8x1xf32>
    %19 = vector.broadcast %18 : vector<8x1xf32> to vector<8x128xf32>
    %20 = arith.subf %14, %19 : vector<8x128xf32>
    %cst_12 = arith.constant 0.000000e+00 : f32
    %21 = vector.shape_cast %2 : vector<1x128xi1> to vector<1x128xi1>
    %22 = vector.broadcast %21 : vector<1x128xi1> to vector<8x128xi1>
    %23 = vector.broadcast %cst_12 : f32 to vector<8x128xf32>
    %24 = arith.select %22, %20, %23 : vector<8x128xi1>, vector<8x128xf32>
    %25 = arith.mulf %24, %24 : vector<8x128xf32>
    %cst_13 = arith.constant dense<0.000000e+00> : vector<8xf32>
    %26 = vector.multi_reduction <add>, %25, %cst_13 [1] : vector<8x128xf32> to vector<8xf32>
    %27 = vector.shape_cast %26 : vector<8xf32> to vector<8x1xf32>
    %cst_14 = arith.constant 3.125000e-02 : f32
    %28 = vector.broadcast %cst_14 : f32 to vector<8x1xf32>
    %29 = arith.mulf %27, %28 : vector<8x1xf32>
    %cst_15 = arith.constant 9.99999974E-6 : f32
    %30 = vector.broadcast %cst_15 : f32 to vector<8x1xf32>
    %31 = arith.addf %29, %30 : vector<8x1xf32>
    %32 = math.rsqrt %31 : vector<8x1xf32>
    %33 = vector.broadcast %32 : vector<8x1xf32> to vector<8x128xf32>
    %34 = arith.mulf %24, %33 : vector<8x128xf32>
    %35 = vector.broadcast %6 : vector<1x128xf32> to vector<8x128xf32>
    %36 = arith.mulf %34, %35 : vector<8x128xf32>
    %37 = vector.broadcast %7 : vector<1x128xf32> to vector<8x128xf32>
    %38 = arith.addf %36, %37 : vector<8x128xf32>
    %cst_16 = arith.constant 0.000000e+00 : f32
    %39 = vector.broadcast %cst_16 : f32 to vector<8x128xf32>
    %40 = arith.maximumf %38, %39 : vector<8x128xf32>
    %41 = arith.truncf %40 : vector<8x128xf32> to vector<8x128xbf16>
    %c0_17 = arith.constant 0 : index
    %c0_18 = arith.constant 0 : index
    %42 = vector.load %arg3[%c0_17, %c0_18] : memref<128x128xbf16, #tpu.memory_space<vmem>>, vector<128x128xbf16>
    %cst_19 = arith.constant dense<0.000000e+00> : vector<8x128xf32>
    %43 = tpu.matmul %41, %42, %cst_19 {dimension_numbers = #tpu.dot_dimension_numbers<[1], [0], [0], [1], [0, 0, 1, 1], [], []>} : vector<8x128xbf16>, vector<128x128xbf16>, vector<8x128xf32> -> vector<8x128xf32>
    %44 = vector.broadcast %8 : vector<1x128xf32> to vector<8x128xf32>
    %45 = arith.addf %43, %44 : vector<8x128xf32>
    %cst_20 = arith.constant dense<0.000000e+00> : vector<8xf32>
    %46 = vector.multi_reduction <add>, %45, %cst_20 [1] : vector<8x128xf32> to vector<8xf32>
    %47 = vector.shape_cast %46 : vector<8xf32> to vector<8x1xf32>
    %cst_21 = arith.constant 3.125000e-02 : f32
    %48 = vector.broadcast %cst_21 : f32 to vector<8x1xf32>
    %49 = arith.mulf %47, %48 : vector<8x1xf32>
    %50 = vector.broadcast %49 : vector<8x1xf32> to vector<8x128xf32>
    %51 = arith.subf %45, %50 : vector<8x128xf32>
    %cst_22 = arith.constant 0.000000e+00 : f32
    %52 = vector.shape_cast %2 : vector<1x128xi1> to vector<1x128xi1>
    %53 = vector.broadcast %52 : vector<1x128xi1> to vector<8x128xi1>
    %54 = vector.broadcast %cst_22 : f32 to vector<8x128xf32>
    %55 = arith.select %53, %51, %54 : vector<8x128xi1>, vector<8x128xf32>
    %56 = arith.mulf %55, %55 : vector<8x128xf32>
    %cst_23 = arith.constant dense<0.000000e+00> : vector<8xf32>
    %57 = vector.multi_reduction <add>, %56, %cst_23 [1] : vector<8x128xf32> to vector<8xf32>
    %58 = vector.shape_cast %57 : vector<8xf32> to vector<8x1xf32>
    %cst_24 = arith.constant 3.125000e-02 : f32
    %59 = vector.broadcast %cst_24 : f32 to vector<8x1xf32>
    %60 = arith.mulf %58, %59 : vector<8x1xf32>
    %cst_25 = arith.constant 9.99999974E-6 : f32
    %61 = vector.broadcast %cst_25 : f32 to vector<8x1xf32>
    %62 = arith.addf %60, %61 : vector<8x1xf32>
    %63 = math.rsqrt %62 : vector<8x1xf32>
    %64 = vector.broadcast %63 : vector<8x1xf32> to vector<8x128xf32>
    %65 = arith.mulf %55, %64 : vector<8x128xf32>
    %66 = vector.broadcast %9 : vector<1x128xf32> to vector<8x128xf32>
    %67 = arith.mulf %65, %66 : vector<8x128xf32>
    %68 = vector.broadcast %10 : vector<1x128xf32> to vector<8x128xf32>
    %69 = arith.addf %67, %68 : vector<8x128xf32>
    %cst_26 = arith.constant 0.000000e+00 : f32
    %70 = vector.broadcast %cst_26 : f32 to vector<8x128xf32>
    %71 = arith.maximumf %69, %70 : vector<8x128xf32>
    %72 = arith.truncf %71 : vector<8x128xf32> to vector<8x128xbf16>
    %c0_27 = arith.constant 0 : index
    %c0_28 = arith.constant 0 : index
    %73 = vector.load %arg4[%c0_27, %c0_28] : memref<128x128xbf16, #tpu.memory_space<vmem>>, vector<128x128xbf16>
    %cst_29 = arith.constant dense<0.000000e+00> : vector<8x128xf32>
    %74 = tpu.matmul %72, %73, %cst_29 {dimension_numbers = #tpu.dot_dimension_numbers<[1], [0], [0], [1], [0, 0, 1, 1], [], []>} : vector<8x128xbf16>, vector<128x128xbf16>, vector<8x128xf32> -> vector<8x128xf32>
    %c0_30 = arith.constant 0 : index
    %c0_31 = arith.constant 0 : index
    %75 = vector.load %arg6[%c0_30, %c0_31] : memref<1x128xf32, #tpu.memory_space<vmem>>, vector<1x128xf32>
    %76 = vector.broadcast %75 : vector<1x128xf32> to vector<8x128xf32>
    %77 = arith.addf %74, %76 : vector<8x128xf32>
    %78 = arith.truncf %77 : vector<8x128xf32> to vector<8x128xbf16>
    %c0_32 = arith.constant 0 : index
    %c0_33 = arith.constant 0 : index
    %79 = vector.load %arg7[%c0_32, %c0_33] : memref<8x128xbf16, #tpu.memory_space<vmem>>, vector<8x128xbf16>
    tpu.vector_store %arg7[%c0_32, %c0_33], %78 {strides = array<i32>} : memref<8x128xbf16, #tpu.memory_space<vmem>>, vector<8x128xbf16>,
    return
  }
  func.func @transform_0(%arg0: i32) -> (i32, i32) {
    %c0_i32 = arith.constant 0 : i32
    %c0_i32_0 = arith.constant 0 : i32
    return %arg0, %c0_i32 : i32, i32
  }
  func.func @transform_1(%arg0: i32) -> (i32, i32) {
    %c0_i32 = arith.constant 0 : i32
    %c0_i32_0 = arith.constant 0 : i32
    %c0_i32_1 = arith.constant 0 : i32
    return %c0_i32, %c0_i32_0 : i32, i32
  }
  func.func @transform_2(%arg0: i32) -> (i32, i32) {
    %c0_i32 = arith.constant 0 : i32
    %c0_i32_0 = arith.constant 0 : i32
    %c0_i32_1 = arith.constant 0 : i32
    return %c0_i32, %c0_i32_0 : i32, i32
  }
  func.func @transform_3(%arg0: i32) -> (i32, i32) {
    %c0_i32 = arith.constant 0 : i32
    %c0_i32_0 = arith.constant 0 : i32
    %c0_i32_1 = arith.constant 0 : i32
    return %c0_i32, %c0_i32_0 : i32, i32
  }
  func.func @transform_4(%arg0: i32) -> (i32, i32) {
    %c0_i32 = arith.constant 0 : i32
    %c0_i32_0 = arith.constant 0 : i32
    %c0_i32_1 = arith.constant 0 : i32
    return %c0_i32, %c0_i32_0 : i32, i32
  }
  func.func @transform_5(%arg0: i32) -> (i32, i32) {
    %c0_i32 = arith.constant 0 : i32
    %c0_i32_0 = arith.constant 0 : i32
    %c0_i32_1 = arith.constant 0 : i32
    return %c0_i32, %c0_i32_0 : i32, i32
  }
  func.func @transform_6(%arg0: i32) -> (i32, i32) {
    %c0_i32 = arith.constant 0 : i32
    %c0_i32_0 = arith.constant 0 : i32
    return %arg0, %c0_i32 : i32, i32
  }
}

</mosaic_0001>

<llo_original>
// kernel: tpu_custom_call.1
$region0: #{tpu_custom_call.1}
  #allocation0 [shape = 'u32[]', space=smem, size = 0x4, offset = 0x4, fixed_abs, tag = 'smem constant byte address 0x4 - core index']
  #allocation1 [shape = 'u32[144,128]{1,0:T(1,128)}', space=vmem, size = 0x12000, scoped, tag = 'internal scratch']
  %s0 = inlined_call_operand.hbm [shape: f32[8,16], index: 0, kind: input, shape index: {}]
  %s1 = inlined_call_operand.hbm [shape: bf16[16,128], index: 1, kind: input, shape index: {}]
  %s2 = inlined_call_operand.hbm [shape: bf16[128,128], index: 2, kind: input, shape index: {}]
  %s3 = inlined_call_operand.hbm [shape: bf16[128,128], index: 3, kind: input, shape index: {}]
  %s4 = inlined_call_operand.hbm [shape: f32[6,128], index: 4, kind: input, shape index: {}]
  %s5 = inlined_call_operand.vmem [shape: f32[1,128], index: 5, kind: input, shape index: {}]
  %s6 = inlined_call_operand.hbm [shape: bf16[8,128], index: 6, kind: output, shape index: {}]
  %s7 = sld [smem:[#allocation0]]
  $region54: #{tpu_custom_call.1} parent=0
    _
  %s9 = ssub.s32 1, %s7
  %s10 = scalar_select 0, %s9, %s7
  $region1: #{tpu_custom_call.1} parent=0
    #allocation2 [shape = 'u8[4096]{0}', space=vmem, size = 0x1000, scoped, tag = 'input window, operand 0, single buffered']
    #allocation3 [shape = 's32[1]{0}', space=sflag, size = 0x4, scoped, tag = 'scoped memory for tpu_custom_call.1']
    #allocation4 [shape = 's32[1]{0}', space=sflag, size = 0x4, scoped, tag = 'scoped memory for tpu_custom_call.1']
    #allocation5 [shape = 'u8[4096]{0}', space=vmem, size = 0x1000, scoped, tag = 'input window, operand 1, single buffered']
    #allocation6 [shape = 's32[1]{0}', space=sflag, size = 0x4, scoped, tag = 'scoped memory for tpu_custom_call.1']
    #allocation7 [shape = 'u8[32768]{0}', space=vmem, size = 0x8000, scoped, tag = 'input window, operand 2, single buffered']
    #allocation8 [shape = 'u8[32768]{0}', space=vmem, size = 0x8000, scoped, tag = 'input window, operand 3, single buffered']
    #allocation9 [shape = 's32[1]{0}', space=sflag, size = 0x4, scoped, tag = 'scoped memory for tpu_custom_call.1']
    #allocation10 [shape = 'u8[4096]{0}', space=vmem, size = 0x1000, scoped, tag = 'input window, operand 4, single buffered']
    #allocation11 [shape = 'u8[2048]{0}', space=vmem, size = 0x800, scoped, tag = 'output window, operand 0, single buffered']
    %11 = vsyncpa [#allocation3], 0
    %12 = vsyncpa [#allocation6], 0
    %13 = vsyncpa [#allocation9], 0
    %14 = vsyncpa [#allocation4], 0
    // Predicated region
    $region2: #{tpu_custom_call.1} parent=1 // pred_check
      _
    $region3: #{tpu_custom_call.1} parent=1 // pred_check_branch
      %16 = sbr.rel (0) target = $region5
    $region4: #{tpu_custom_call.1} parent=1 // pred_region
      %s18 = ssub.s32 128, 128
      %19 = vsyncadd [#allocation3], %s18
      %s21 = sshll.u32 [#allocation2], 4
      %s22 = int_to_ptr.vmem [resolvable:$true] %s21
      %24 = dma.hbm_to_vmem [thread:$0]  %s0, 128, %s22, [#allocation3]
    $region5: #{tpu_custom_call.1} parent=1 // pred_fallthru
      _
    // Predicated region
    $region6: #{tpu_custom_call.1} parent=1 // pred_check
      _
    $region7: #{tpu_custom_call.1} parent=1 // pred_check_branch
      %26 = sbr.rel (0) target = $region9
    $region8: #{tpu_custom_call.1} parent=1 // pred_region
      %s28 = ssub.s32 128, 128
      %29 = vsyncadd [#allocation6], %s28
      %s30 = sshll.u32 [#allocation5], 4
      %s31 = int_to_ptr.vmem [resolvable:$true] %s30
      %36 = dma.hbm_to_vmem [thread:$0]  %s1, 128, %s31, [#allocation6], 64, 64, 4
    $region9: #{tpu_custom_call.1} parent=1 // pred_fallthru
      _
    // Predicated region
    $region10: #{tpu_custom_call.1} parent=1 // pred_check
      _
    $region11: #{tpu_custom_call.1} parent=1 // pred_check_branch
      %38 = sbr.rel (0) target = $region13
    $region12: #{tpu_custom_call.1} parent=1 // pred_region
      %s40 = ssub.s32 1024, 1024
      %41 = vsyncadd [#allocation6], %s40
      %s42 = sshll.u32 [#allocation7], 4
      %s43 = int_to_ptr.vmem [resolvable:$true] %s42
      %48 = dma.hbm_to_vmem [thread:$0]  %s2, 1024, %s43, [#allocation6], 64, 64, 4
    $region13: #{tpu_custom_call.1} parent=1 // pred_fallthru
      _
    // Predicated region
    $region14: #{tpu_custom_call.1} parent=1 // pred_check
      _
    $region15: #{tpu_custom_call.1} parent=1 // pred_check_branch
      %50 = sbr.rel (0) target = $region17
    $region16: #{tpu_custom_call.1} parent=1 // pred_region
      %s52 = ssub.s32 1024, 1024
      %53 = vsyncadd [#allocation9], %s52
      %s54 = sshll.u32 [#allocation8], 4
      %s55 = int_to_ptr.vmem [resolvable:$true] %s54
      %60 = dma.hbm_to_vmem [thread:$0]  %s3, 1024, %s55, [#allocation9], 64, 64, 4
    $region17: #{tpu_custom_call.1} parent=1 // pred_fallthru
      _
    // Predicated region
    $region18: #{tpu_custom_call.1} parent=1 // pred_check
      _
    $region19: #{tpu_custom_call.1} parent=1 // pred_check_branch
      %62 = sbr.rel (0) target = $region21
    $region20: #{tpu_custom_call.1} parent=1 // pred_region
      %s64 = ssub.s32 128, 128
      %65 = vsyncadd [#allocation9], %s64
      %s67 = sshll.u32 [#allocation10], 4
      %s68 = int_to_ptr.vmem [resolvable:$true] %s67
      %70 = dma.hbm_to_vmem [thread:$0]  %s4, 128, %s68, [#allocation9]
    $region21: #{tpu_custom_call.1} parent=1 // pred_fallthru
      _
    // Predicated region
    $region22: #{tpu_custom_call.1} parent=1 // pred_check
      _
    $region23: #{tpu_custom_call.1} parent=1 // pred_check_branch
      %72 = sbr.rel (0) target = $region25
    $region24: #{tpu_custom_call.1} parent=1 // pred_region
      _
    $region25: #{tpu_custom_call.1} parent=1 // pred_fallthru
      _
    // Predicated region
    $region26: #{tpu_custom_call.1} parent=1 // pred_check
      _
    $region27: #{tpu_custom_call.1} parent=1 // pred_check_branch
      %74 = sbr.rel (0) target = $region29
    $region28: #{tpu_custom_call.1} parent=1 // pred_region
      %75 = dma.done [#allocation3], 128
    $region29: #{tpu_custom_call.1} parent=1 // pred_fallthru
      _
    // Predicated region
    $region30: #{tpu_custom_call.1} parent=1 // pred_check
      _
    $region31: #{tpu_custom_call.1} parent=1 // pred_check_branch
      %77 = sbr.rel (0) target = $region33
    $region32: #{tpu_custom_call.1} parent=1 // pred_region
      %78 = dma.done [#allocation6], 128
    $region33: #{tpu_custom_call.1} parent=1 // pred_fallthru
      _
    // Predicated region
    $region34: #{tpu_custom_call.1} parent=1 // pred_check
      _
    $region35: #{tpu_custom_call.1} parent=1 // pred_check_branch
      %80 = sbr.rel (0) target = $region37
    $region36: #{tpu_custom_call.1} parent=1 // pred_region
      %81 = dma.done [#allocation6], 1024
    $region37: #{tpu_custom_call.1} parent=1 // pred_fallthru
      _
    // Predicated region
    $region38: #{tpu_custom_call.1} parent=1 // pred_check
      _
    $region39: #{tpu_custom_call.1} parent=1 // pred_check_branch
      %83 = sbr.rel (0) target = $region41
    $region40: #{tpu_custom_call.1} parent=1 // pred_region
      %84 = dma.done [#allocation9], 1024
    $region41: #{tpu_custom_call.1} parent=1 // pred_fallthru
      _
    // Predicated region
    $region42: #{tpu_custom_call.1} parent=1 // pred_check
      _
    $region43: #{tpu_custom_call.1} parent=1 // pred_check_branch
      %86 = sbr.rel (0) target = $region45
    $region44: #{tpu_custom_call.1} parent=1 // pred_region
      %87 = dma.done [#allocation9], 128
    $region45: #{tpu_custom_call.1} parent=1 // pred_fallthru
      _
    %v89 = vlaneseq
    %v90 = vand.u32 %v89, 127
    %vm91 = vcmp.lt.s32.totalorder %v90, 32
    %v92 = vld [vmem:[#allocation2] sm:$0xff]
    %v93 = vpack.c.bf16 %v92, %v92
    %v94 = vld [vmem:[#allocation10] sm:$0x1]
    %v95 = vld [vmem:[#allocation10 + $0x1] sm:$0x1]
    %v96 = vld [vmem:[#allocation10 + $0x2] sm:$0x1]
    %v97 = vld [vmem:[#allocation10 + $0x3] sm:$0x1]
    %v98 = vld [vmem:[#allocation10 + $0x4] sm:$0x1]
    %v99 = vld [vmem:[#allocation10 + $0x5] sm:$0x1]
    %v100 = vld [vmem:[#allocation5] sm:$0xf]
    %v101 = vld [vmem:[#allocation5 + $0x4] sm:$0xf]
    %v102 = vlaneseq
    %v103 = vshrl.u32 %v102, 7
    %v104 = vsub.s32 0, %v103
    %v105 = vrot.slane %v94, %v104
    %v108 = vunpack.c.l.b16 %v100
    %v109 = vunpack.c.l.b16 %v101
    %v110 = vpack.c.b16 %v109, %v108
    %vm112 = vcmask 130048
    %v114 = vsel %vm112, %v93, 0
    %116 = vmatprep.subr.bf16.mxu0 0
    %117 = vmatpush1.bf16.msra.mxu0 0
    %118 = vmatprep.subr.bf16.mxu0 0
    %119 = vmatpush1.bf16.msra.mxu0 0
    %120 = vmatprep.subr.bf16.mxu0 0
    %121 = vmatpush1.bf16.msra.mxu0 0
    %122 = vmatprep.subr.bf16.mxu0 0
    %123 = vmatpush1.bf16.msra.mxu0 0
    %124 = vmatprep.subr.bf16.mxu0 0
    %125 = vmatpush1.bf16.msra.mxu0 0
    %126 = vmatprep.subr.bf16.mxu0 0
    %127 = vmatpush1.bf16.msra.mxu0 0
    %128 = vmatprep.subr.bf16.mxu0 0
    %129 = vmatpush1.bf16.msra.mxu0 0
    %130 = vmatprep.subr.bf16.mxu0 0
    %131 = vmatpush1.bf16.msra.mxu0 %v110
    %132 = vmatprep.subr.bf16.mxu0 0
    %133 = vmatpush2.bf16.msra.mxu0 0
    %134 = vmatprep.subr.bf16.mxu0 0
    %135 = vmatpush2.bf16.msra.mxu0 0
    %136 = vmatprep.subr.bf16.mxu0 0
    %137 = vmatpush2.bf16.msra.mxu0 0
    %138 = vmatprep.subr.bf16.mxu0 0
    %139 = vmatpush2.bf16.msra.mxu0 0
    %140 = vmatprep.subr.bf16.mxu0 0
    %141 = vmatpush2.bf16.msra.mxu0 0
    %142 = vmatprep.subr.bf16.mxu0 0
    %143 = vmatpush2.bf16.msra.mxu0 0
    %144 = vmatprep.subr.bf16.mxu0 0
    %145 = vmatpush2.bf16.msra.mxu0 0
    %146 = vmatprep.subr.bf16.mxu0 0
    %147 = vmatpush2.bf16.msra.mxu0 0
    %148 = vmatprep.mubr.bf16.mxu0 0
    %149 = vmatmul.mubr.bf16.gmra.mxu0 %v114
    %v150 = vpop.f32.mrf.mxu0
    %v151 = vadd.f32 %v105, %v150
    %v152 = vpop.f32.mrf.mxu0
    %v153 = vpop.f32.mrf.mxu0
    %v154 = vpop.f32.mrf.mxu0
    %155 = vdwg.mxu0
    %156 = vadd.xlane.f32.xlu0 %v151
    %v157 = vpop.xlane.xlu0 %156
    %v158 = vmul.f32 %v157, 0.03125
    %v159 = vsub.f32 %v151, %v158
    %v160 = vsel %vm91, 1, 0
    %vm161 = vcmp.eq.s32.totalorder %v160, 1
    %v162 = vsel %vm161, %v159, 0.0
    %v163 = vmul.f32 %v162, %v162
    %164 = vadd.xlane.f32.xlu0 %v163
    %v165 = vpop.xlane.xlu0 %164
    %v166 = vmul.f32 %v165, 0.03125
    %v167 = vadd.f32 %v166, 1e-05
    %v168 = vrsqrt.pop %v167
    %v169 = vmul.f32 %v162, %v168
    %v170 = vlaneseq
    %v171 = vshrl.u32 %v170, 7
    %v172 = vsub.s32 0, %v171
    %v173 = vrot.slane %v95, %v172
    %v174 = vmul.f32 %v169, %v173
    %v175 = vlaneseq
    %v176 = vshrl.u32 %v175, 7
    %v177 = vsub.s32 0, %v176
    %v178 = vrot.slane %v96, %v177
    %v179 = vadd.f32 %v174, %v178
    %v180 = vmax.f32 %v179, 0.0
    %v181 = vpack.c.bf16 %v180, %v180
    %v182 = vld [vmem:[#allocation7] sm:$0xf]
    %v183 = vld [vmem:[#allocation7 + $0x4] sm:$0xf]
    %v184 = vld [vmem:[#allocation7 + $0x8] sm:$0xf]
    %v185 = vld [vmem:[#allocation7 + $0xc] sm:$0xf]
    %v186 = vld [vmem:[#allocation7 + $0x10] sm:$0xf]
    %v187 = vld [vmem:[#allocation7 + $0x14] sm:$0xf]
    %v188 = vld [vmem:[#allocation7 + $0x18] sm:$0xf]
    %v189 = vld [vmem:[#allocation7 + $0x1c] sm:$0xf]
    %v190 = vld [vmem:[#allocation7 + $0x20] sm:$0xf]
    %v191 = vld [vmem:[#allocation7 + $0x24] sm:$0xf]
    %v192 = vld [vmem:[#allocation7 + $0x28] sm:$0xf]
    %v193 = vld [vmem:[#allocation7 + $0x2c] sm:$0xf]
    %v194 = vld [vmem:[#allocation7 + $0x30] sm:$0xf]
    %v195 = vld [vmem:[#allocation7 + $0x34] sm:$0xf]
    %v196 = vld [vmem:[#allocation7 + $0x38] sm:$0xf]
    %v197 = vld [vmem:[#allocation7 + $0x3c] sm:$0xf]
    %v198 = vlaneseq
    %v199 = vshrl.u32 %v198, 7
    %v200 = vsub.s32 0, %v199
    %v201 = vrot.slane %v97, %v200
    %v218 = vunpack.c.l.b16 %v182
    %v219 = vunpack.c.l.b16 %v183
    %v220 = vunpack.c.l.b16 %v184
    %v221 = vunpack.c.l.b16 %v185
    %v222 = vunpack.c.l.b16 %v186
    %v223 = vunpack.c.l.b16 %v187
    %v224 = vunpack.c.l.b16 %v188
    %v225 = vunpack.c.l.b16 %v189
    %v226 = vunpack.c.l.b16 %v190
    %v227 = vunpack.c.l.b16 %v191
    %v228 = vunpack.c.l.b16 %v192
    %v229 = vunpack.c.l.b16 %v193
    %v230 = vunpack.c.l.b16 %v194
    %v231 = vunpack.c.l.b16 %v195
    %v232 = vunpack.c.l.b16 %v196
    %v233 = vunpack.c.l.b16 %v197
    %v234 = vpack.c.b16 %v219, %v218
    %v235 = vpack.c.b16 %v221, %v220
    %v236 = vpack.c.b16 %v223, %v222
    %v237 = vpack.c.b16 %v225, %v224
    %v238 = vpack.c.b16 %v227, %v226
    %v239 = vpack.c.b16 %v229, %v228
    %v240 = vpack.c.b16 %v231, %v230
    %v241 = vpack.c.b16 %v233, %v232
    %250 = vmatprep.subr.bf16.mxu0 0
    %251 = vmatpush1.bf16.msra.mxu0 %v241
    %252 = vmatprep.subr.bf16.mxu0 0
    %253 = vmatpush1.bf16.msra.mxu0 %v240
    %254 = vmatprep.subr.bf16.mxu0 0
    %255 = vmatpush1.bf16.msra.mxu0 %v239
    %256 = vmatprep.subr.bf16.mxu0 0
    %257 = vmatpush1.bf16.msra.mxu0 %v238
    %258 = vmatprep.subr.bf16.mxu0 0
    %259 = vmatpush1.bf16.msra.mxu0 %v237
    %260 = vmatprep.subr.bf16.mxu0 0
    %261 = vmatpush1.bf16.msra.mxu0 %v236
    %262 = vmatprep.subr.bf16.mxu0 0
    %263 = vmatpush1.bf16.msra.mxu0 %v235
    %264 = vmatprep.subr.bf16.mxu0 0
    %265 = vmatpush1.bf16.msra.mxu0 %v234
    %266 = vmatprep.subr.bf16.mxu0 0
    %267 = vmatpush2.bf16.msra.mxu0 0
    %268 = vmatprep.subr.bf16.mxu0 0
    %269 = vmatpush2.bf16.msra.mxu0 0
    %270 = vmatprep.subr.bf16.mxu0 0
    %271 = vmatpush2.bf16.msra.mxu0 0
    %272 = vmatprep.subr.bf16.mxu0 0
    %273 = vmatpush2.bf16.msra.mxu0 0
    %274 = vmatprep.subr.bf16.mxu0 0
    %275 = vmatpush2.bf16.msra.mxu0 0
    %276 = vmatprep.subr.bf16.mxu0 0
    %277 = vmatpush2.bf16.msra.mxu0 0
    %278 = vmatprep.subr.bf16.mxu0 0
    %279 = vmatpush2.bf16.msra.mxu0 0
    %280 = vmatprep.subr.bf16.mxu0 0
    %281 = vmatpush2.bf16.msra.mxu0 0
    %282 = vmatprep.mubr.bf16.mxu0 0
    %283 = vmatmul.mubr.bf16.gmra.mxu0 %v181
    %v284 = vpop.f32.mrf.mxu0
    %v285 = vadd.f32 %v201, %v284
    %v286 = vpop.f32.mrf.mxu0
    %v287 = vpop.f32.mrf.mxu0
    %v288 = vpop.f32.mrf.mxu0
    %289 = vdwg.mxu0
    %290 = vadd.xlane.f32.xlu0 %v285
    %v291 = vpop.xlane.xlu0 %290
    %v292 = vmul.f32 %v291, 0.03125
    %v293 = vsub.f32 %v285, %v292
    %v294 = vsel %vm161, %v293, 0.0
    %v295 = vmul.f32 %v294, %v294
    %296 = vadd.xlane.f32.xlu0 %v295
    %v297 = vpop.xlane.xlu0 %296
    %v298 = vmul.f32 %v297, 0.03125
    %v299 = vadd.f32 %v298, 1e-05
    %v300 = vrsqrt.pop %v299
    %v301 = vmul.f32 %v294, %v300
    %v302 = vlaneseq
    %v303 = vshrl.u32 %v302, 7
    %v304 = vsub.s32 0, %v303
    %v305 = vrot.slane %v98, %v304
    %v306 = vmul.f32 %v301, %v305
    %v307 = vlaneseq
    %v308 = vshrl.u32 %v307, 7
    %v309 = vsub.s32 0, %v308
    %v310 = vrot.slane %v99, %v309
    %v311 = vadd.f32 %v306, %v310
    %v312 = vmax.f32 %v311, 0.0
    %v313 = vpack.c.bf16 %v312, %v312
    %v314 = vld [vmem:[#allocation8] sm:$0xf]
    %v315 = vld [vmem:[#allocation8 + $0x4] sm:$0xf]
    %v316 = vld [vmem:[#allocation8 + $0x8] sm:$0xf]
    %v317 = vld [vmem:[#allocation8 + $0xc] sm:$0xf]
    %v318 = vld [vmem:[#allocation8 + $0x10] sm:$0xf]
    %v319 = vld [vmem:[#allocation8 + $0x14] sm:$0xf]
    %v320 = vld [vmem:[#allocation8 + $0x18] sm:$0xf]
    %v321 = vld [vmem:[#allocation8 + $0x1c] sm:$0xf]
    %v322 = vld [vmem:[#allocation8 + $0x20] sm:$0xf]
    %v323 = vld [vmem:[#allocation8 + $0x24] sm:$0xf]
    %v324 = vld [vmem:[#allocation8 + $0x28] sm:$0xf]
    %v325 = vld [vmem:[#allocation8 + $0x2c] sm:$0xf]
    %v326 = vld [vmem:[#allocation8 + $0x30] sm:$0xf]
    %v327 = vld [vmem:[#allocation8 + $0x34] sm:$0xf]
    %v328 = vld [vmem:[#allocation8 + $0x38] sm:$0xf]
    %v329 = vld [vmem:[#allocation8 + $0x3c] sm:$0xf]
    %v330 = vld [vmem:[%s5] sm:$0x1]
    %v332 = vlaneseq
    %v333 = vshrl.u32 %v332, 7
    %v334 = vsub.s32 0, %v333
    %v335 = vrot.slane %v330, %v334
    %v353 = vunpack.c.l.b16 %v314
    %v354 = vunpack.c.l.b16 %v315
    %v355 = vunpack.c.l.b16 %v316
    %v356 = vunpack.c.l.b16 %v317
    %v357 = vunpack.c.l.b16 %v318
    %v358 = vunpack.c.l.b16 %v319
    %v359 = vunpack.c.l.b16 %v320
    %v360 = vunpack.c.l.b16 %v321
    %v361 = vunpack.c.l.b16 %v322
    %v362 = vunpack.c.l.b16 %v323
    %v363 = vunpack.c.l.b16 %v324
    %v364 = vunpack.c.l.b16 %v325
    %v365 = vunpack.c.l.b16 %v326
    %v366 = vunpack.c.l.b16 %v327
    %v367 = vunpack.c.l.b16 %v328
    %v368 = vunpack.c.l.b16 %v329
    %v369 = vpack.c.b16 %v354, %v353
    %v370 = vpack.c.b16 %v356, %v355
    %v371 = vpack.c.b16 %v358, %v357
    %v372 = vpack.c.b16 %v360, %v359
    %v373 = vpack.c.b16 %v362, %v361
    %v374 = vpack.c.b16 %v364, %v363
    %v375 = vpack.c.b16 %v366, %v365
    %v376 = vpack.c.b16 %v368, %v367
    %385 = vmatprep.subr.bf16.mxu0 0
    %386 = vmatpush1.bf16.msra.mxu0 %v376
    %387 = vmatprep.subr.bf16.mxu0 0
    %388 = vmatpush1.bf16.msra.mxu0 %v375
    %389 = vmatprep.subr.bf16.mxu0 0
    %390 = vmatpush1.bf16.msra.mxu0 %v374
    %391 = vmatprep.subr.bf16.mxu0 0
    %392 = vmatpush1.bf16.msra.mxu0 %v373
    %393 = vmatprep.subr.bf16.mxu0 0
    %394 = vmatpush1.bf16.msra.mxu0 %v372
    %395 = vmatprep.subr.bf16.mxu0 0
    %396 = vmatpush1.bf16.msra.mxu0 %v371
    %397 = vmatprep.subr.bf16.mxu0 0
    %398 = vmatpush1.bf16.msra.mxu0 %v370
    %399 = vmatprep.subr.bf16.mxu0 0
    %400 = vmatpush1.bf16.msra.mxu0 %v369
    %401 = vmatprep.subr.bf16.mxu0 0
    %402 = vmatpush2.bf16.msra.mxu0 0
    %403 = vmatprep.subr.bf16.mxu0 0
    %404 = vmatpush2.bf16.msra.mxu0 0
    %405 = vmatprep.subr.bf16.mxu0 0
    %406 = vmatpush2.bf16.msra.mxu0 0
    %407 = vmatprep.subr.bf16.mxu0 0
    %408 = vmatpush2.bf16.msra.mxu0 0
    %409 = vmatprep.subr.bf16.mxu0 0
    %410 = vmatpush2.bf16.msra.mxu0 0
    %411 = vmatprep.subr.bf16.mxu0 0
    %412 = vmatpush2.bf16.msra.mxu0 0
    %413 = vmatprep.subr.bf16.mxu0 0
    %414 = vmatpush2.bf16.msra.mxu0 0
    %415 = vmatprep.subr.bf16.mxu0 0
    %416 = vmatpush2.bf16.msra.mxu0 0
    %417 = vmatprep.mubr.bf16.mxu0 0
    %418 = vmatmul.mubr.bf16.gmra.mxu0 %v313
    %v419 = vpop.f32.mrf.mxu0
    %v420 = vadd.f32 %v335, %v419
    %v421 = vpop.f32.mrf.mxu0
    %v422 = vpop.f32.mrf.mxu0
    %v423 = vpop.f32.mrf.mxu0
    %424 = vdwg.mxu0
    %v425 = vpack.c.bf16 %v420, %v420
    %426 = vst [vmem:[#allocation11] sm:$0xf] %v425
    // Predicated region
    $region46: #{tpu_custom_call.1} parent=1 // pred_check
      _
    $region47: #{tpu_custom_call.1} parent=1 // pred_check_branch
      %428 = sbr.rel (0) target = $region49
    $region48: #{tpu_custom_call.1} parent=1 // pred_region
      %s430 = ssub.s32 64, 64
      %431 = vsyncadd [#allocation4], %s430
      %s433 = sshll.u32 [#allocation11], 4
      %s434 = int_to_ptr.vmem [resolvable:$true] %s433
      %436 = dma.vmem_to_hbm [thread:$0]  %s434, 64, %s6, [#allocation4]
    $region49: #{tpu_custom_call.1} parent=1 // pred_fallthru
      _
    // Predicated region
    $region50: #{tpu_custom_call.1} parent=1 // pred_check
      _
    $region51: #{tpu_custom_call.1} parent=1 // pred_check_branch
      %438 = sbr.rel (0) target = $region53
    $region52: #{tpu_custom_call.1} parent=1 // pred_region
      %439 = dma.done [#allocation4], 64
    $region53: #{tpu_custom_call.1} parent=1 // pred_fallthru
      _
    %440 = vsyncpa [#allocation3], 1
    %441 = vsyncpa [#allocation6], 1
    %442 = vsyncpa [#allocation9], 1
    %443 = vsyncpa [#allocation4], 1

</llo_original>
